<compile_context>
chip_gen: v7x
topology: tpu7x:2x2x1
jax: 0.10.0
libtpu: 0.0.40
codegen_flags: <defaults>
</compile_context>

<pallas_src>
import functools

import jax
import jax.numpy as jnp
from jax import lax
from jax.experimental import pallas as pl
from jax.experimental.pallas import tpu as pltpu

ALPHA = 0.1
BETA = 0.1
COS_EPS = 1e-3  # nn.CosineSimilarity(eps=0.001)


# ----------------------------- fused kernel -----------------------------------

def _fused_reg_loss_kernel(*refs, num_views, inv_numels, inv_l2_b, inv_l1_b,
                           inv_cos_denom, separate_l1, alpha, beta):
    """Emits the 5 final scalars to SMEM:
       o[0] = total loss, o[1] = recon, o[2] = recon_graph, o[3] = cos, o[4] = graph.
    """
    view_refs = refs[:num_views]
    recon_refs = refs[num_views:2 * num_views]
    idx = 2 * num_views
    ig_ref = refs[idx]
    rg_ref = refs[idx + 1]
    idx += 2
    if separate_l1:
        g1_ref = refs[idx]
        idx += 1
    else:
        g1_ref = ig_ref          # one read of input_graph serves both graph terms
    emb_ref = refs[idx]
    o_ref = refs[idx + 1]

    # ---- 1) reconstruction loss: mean over views of per-view MSE --------------
    recon_loss = 0.0
    for v_ref, r_ref, inv_n in zip(view_refs, recon_refs, inv_numels):
        d = v_ref[...].astype(jnp.float32) - r_ref[...].astype(jnp.float32)
        recon_loss = recon_loss + jnp.sum(d * d) * inv_n
    recon_loss = recon_loss * (1.0 / num_views)

    # ---- 2) graph reconstruction loss: ||ig - rg||_F / b ----------------------
    dg = ig_ref[...].astype(jnp.float32) - rg_ref[...].astype(jnp.float32)
    rg_sq = jnp.sum(dg * dg)
    # sqrt on a (1,1) tile (EUP) instead of a scalar transcendental, then reduce back.
    recon_graph_loss = jnp.sum(jnp.sqrt(jnp.broadcast_to(rg_sq, (1, 1)))) * inv_l2_b

    # ---- 3) sparsity loss: sum |G - I| / b  (eye from a 2-iota equality) ------
    g = g1_ref[...].astype(jnp.float32)
    di = lax.broadcasted_iota(jnp.int32, g.shape, g.ndim - 2)
    dj = lax.broadcasted_iota(jnp.int32, g.shape, g.ndim - 1)
    eye_g = (di == dj).astype(jnp.float32)
    graph_loss = jnp.sum(jnp.abs(g - eye_g)) * inv_l1_b

    # ---- 4) orthogonality loss: sum(|cos| - I) / (b*n*(n-1)) ------------------
    e = emb_ref[...].astype(jnp.float32)                      # (B, N, D)
    gram = jnp.einsum('bnd,bmd->bnm', e, e,
                      preferred_element_type=jnp.float32)     # per-batch Gram (B, N, N)
    ee = e * e
    sq_col = jnp.sum(ee, axis=-1, keepdims=True)              # (B, N, 1) squared norms
    sq_row = jnp.sum(ee, axis=-1)[:, None, :]                 # (B, 1, N)
    inv_den = lax.rsqrt(jnp.maximum(sq_col * sq_row, COS_EPS * COS_EPS))
    cos = gram * inv_den                                      # == torch cosine_similarity
    ri = lax.broadcasted_iota(jnp.int32, gram.shape, 1)
    ci = lax.broadcasted_iota(jnp.int32, gram.shape, 2)
    eye_e = (ri == ci).astype(jnp.float32)
    cos_loss = jnp.sum(jnp.abs(cos) - eye_e) * inv_cos_denom

    # ---- 5) fused scalar epilogue ---------------------------------------------
    o_ref[0] = recon_loss + recon_graph_loss + alpha * cos_loss + beta * graph_loss
    o_ref[1] = recon_loss
    o_ref[2] = recon_graph_loss
    o_ref[3] = cos_loss
    o_ref[4] = graph_loss


# ----------------------------- wrapper -----------------------------------------

def reg_loss(views, views_recon, latent_embeddings, input_graph, recon_graph,
             alpha=ALPHA, beta=BETA):
    num_views = len(views)
    assert num_views == len(views_recon) and num_views > 0

    if input_graph.ndim > 3:
        # Rare 4-D path: the L2 term uses mean over the leading dim (as in the module);
        # the L1 term keeps the raw 4-D graph.
        ig3 = jnp.squeeze(jnp.mean(input_graph, axis=0))
        l1_b = input_graph.shape[1]
        separate_l1 = True
    else:
        ig3 = input_graph
        l1_b = input_graph.shape[0]
        separate_l1 = False
    assert ig3.shape == recon_graph.shape
    l2_b = ig3.shape[0]

    B, N, D = latent_embeddings.shape

    # Natural-layout inputs, no stacking / padding / upcasting copies.
    args = list(views) + list(views_recon) + [ig3, recon_graph]
    if separate_l1:
        args.append(input_graph)
    args.append(latent_embeddings)

    kernel = functools.partial(
        _fused_reg_loss_kernel,
        num_views=num_views,
        inv_numels=tuple(1.0 / v.size for v in views),
        inv_l2_b=1.0 / l2_b,
        inv_l1_b=1.0 / l1_b,
        inv_cos_denom=1.0 / (B * N * (N - 1)),
        separate_l1=separate_l1,
        alpha=float(alpha),
        beta=float(beta),
    )

    # Single grid point: everything fits in VMEM at these shapes; the 5 final
    # scalars land in SMEM (no tiny-tile VMEM writeback, no XLA epilogue math).
    out = pl.pallas_call(
        kernel,
        out_shape=jax.ShapeDtypeStruct((5,), jnp.float32),
        in_specs=[pl.BlockSpec(memory_space=pltpu.MemorySpace.VMEM)] * len(args),
        out_specs=pl.BlockSpec(memory_space=pltpu.MemorySpace.SMEM),
    )(*args)

    return out[0], out[1], out[2], out[3], out[4]


# ----------------------------- reference (pure JAX, for sanity) ----------------

def _reg_loss_ref(views, views_recon, emb, input_graph, recon_graph,
                  alpha=ALPHA, beta=BETA):
    recon = sum(jnp.mean((v - r) ** 2) for v, r in zip(views, views_recon)) / len(views)
    ig = input_graph
    if ig.ndim > 3:
        ig = jnp.squeeze(jnp.mean(ig, axis=0))
    rg = jnp.sqrt(jnp.sum((ig - recon_graph) ** 2)) / ig.shape[0]
    b, n, _ = emb.shape
    norms = jnp.linalg.norm(emb, axis=-1)
    cos = jnp.einsum('bnd,bmd->bnm', emb, emb) / jnp.maximum(
        norms[:, :, None] * norms[:, None, :], COS_EPS)
    closs = jnp.sum(jnp.abs(cos) - jnp.eye(n)[None]) / (b * n * (n - 1))
    gb = input_graph.shape[0] if input_graph.ndim == 3 else input_graph.shape[1]
    gloss = jnp.sum(jnp.abs(input_graph - jnp.eye(input_graph.shape[-1]))) / gb
    return recon + rg + alpha * closs + beta * gloss, recon, rg, closs, gloss


# ----------------------------- main -------------------------------------------

if __name__ == "__main__":
    key = jax.random.PRNGKey(0)
    kv1, kv2, kr1, kr2, ke, kg, krg = jax.random.split(key, 7)

    B, N, D = 2, 8, 32
    views = [jax.random.normal(kv1, (B, N, D), jnp.float32),
             jax.random.normal(kv2, (B, N, D), jnp.float32)]
    views_recon = [jax.random.normal(kr1, (B, N, D), jnp.float32),
                   jax.random.normal(kr2, (B, N, D), jnp.float32)]
    latent_embeddings = jax.random.normal(ke, (B, N, D), jnp.float32)
    input_graph = jax.random.normal(kg, (B, N, N), jnp.float32)
    recon_graph = jax.random.normal(krg, (B, N, N), jnp.float32)

    fn = jax.jit(reg_loss)
    out = jax.block_until_ready(fn(views, views_recon, latent_embeddings,
                                   input_graph, recon_graph))

    ref = _reg_loss_ref(views, views_recon, latent_embeddings, input_graph, recon_graph)
    for a, b in zip(out, ref):
        assert jnp.allclose(a, b, rtol=1e-4, atol=1e-4), (a, b)

    print("KERNEL_OK")
</pallas_src>

<mosaic_0001>
module attributes {stable_mosaic.version = 11 : i64} {
  func.func @_fused_reg_loss_kernel(%arg0: memref<2x8x32xf32, #tpu.memory_space<vmem>>, %arg1: memref<2x8x32xf32, #tpu.memory_space<vmem>>, %arg2: memref<2x8x32xf32, #tpu.memory_space<vmem>>, %arg3: memref<2x8x32xf32, #tpu.memory_space<vmem>>, %arg4: memref<2x8x8xf32, #tpu.memory_space<vmem>>, %arg5: memref<2x8x8xf32, #tpu.memory_space<vmem>>, %arg6: memref<2x8x32xf32, #tpu.memory_space<vmem>>, %arg7: memref<5xf32, #tpu.memory_space<smem>>) attributes {dimension_semantics = [], scalar_prefetch = 0 : i64, scratch_operands = 0 : i64, tpu.core_type = #tpu.core_type<tc>} {
    %c0 = arith.constant 0 : index
    %c0_0 = arith.constant 0 : index
    %c0_1 = arith.constant 0 : index
    %0 = vector.load %arg0[%c0, %c0_0, %c0_1] : memref<2x8x32xf32, #tpu.memory_space<vmem>>, vector<2x8x32xf32>
    %c0_2 = arith.constant 0 : index
    %c0_3 = arith.constant 0 : index
    %c0_4 = arith.constant 0 : index
    %1 = vector.load %arg2[%c0_2, %c0_3, %c0_4] : memref<2x8x32xf32, #tpu.memory_space<vmem>>, vector<2x8x32xf32>
    %2 = arith.subf %0, %1 : vector<2x8x32xf32>
    %3 = arith.mulf %2, %2 : vector<2x8x32xf32>
    %4 = vector.shape_cast %3 : vector<2x8x32xf32> to vector<1x2x8x32xf32>
    %cst = arith.constant dense<0.000000e+00> : vector<1xf32>
    %5 = vector.multi_reduction <add>, %4, %cst [1, 2, 3] : vector<1x2x8x32xf32> to vector<1xf32>
    %6 = vector.shape_cast %5 : vector<1xf32> to vector<1x1x1x1xf32>
    %7 = vector.extract %6[0, 0, 0, 0] : f32 from vector<1x1x1x1xf32>
    %cst_5 = arith.constant 0.001953125 : f32
    %8 = arith.mulf %7, %cst_5 : f32
    %cst_6 = arith.constant 0.000000e+00 : f32
    %9 = arith.addf %cst_6, %8 : f32
    %c0_7 = arith.constant 0 : index
    %c0_8 = arith.constant 0 : index
    %c0_9 = arith.constant 0 : index
    %10 = vector.load %arg1[%c0_7, %c0_8, %c0_9] : memref<2x8x32xf32, #tpu.memory_space<vmem>>, vector<2x8x32xf32>
    %c0_10 = arith.constant 0 : index
    %c0_11 = arith.constant 0 : index
    %c0_12 = arith.constant 0 : index
    %11 = vector.load %arg3[%c0_10, %c0_11, %c0_12] : memref<2x8x32xf32, #tpu.memory_space<vmem>>, vector<2x8x32xf32>
    %12 = arith.subf %10, %11 : vector<2x8x32xf32>
    %13 = arith.mulf %12, %12 : vector<2x8x32xf32>
    %14 = vector.shape_cast %13 : vector<2x8x32xf32> to vector<1x2x8x32xf32>
    %cst_13 = arith.constant dense<0.000000e+00> : vector<1xf32>
    %15 = vector.multi_reduction <add>, %14, %cst_13 [1, 2, 3] : vector<1x2x8x32xf32> to vector<1xf32>
    %16 = vector.shape_cast %15 : vector<1xf32> to vector<1x1x1x1xf32>
    %17 = vector.extract %16[0, 0, 0, 0] : f32 from vector<1x1x1x1xf32>
    %cst_14 = arith.constant 0.001953125 : f32
    %18 = arith.mulf %17, %cst_14 : f32
    %19 = arith.addf %9, %18 : f32
    %cst_15 = arith.constant 5.000000e-01 : f32
    %20 = arith.mulf %19, %cst_15 : f32
    %c0_16 = arith.constant 0 : index
    %c0_17 = arith.constant 0 : index
    %c0_18 = arith.constant 0 : index
    %21 = vector.load %arg4[%c0_16, %c0_17, %c0_18] : memref<2x8x8xf32, #tpu.memory_space<vmem>>, vector<2x8x8xf32>
    %c0_19 = arith.constant 0 : index
    %c0_20 = arith.constant 0 : index
    %c0_21 = arith.constant 0 : index
    %22 = vector.load %arg5[%c0_19, %c0_20, %c0_21] : memref<2x8x8xf32, #tpu.memory_space<vmem>>, vector<2x8x8xf32>
    %23 = arith.subf %21, %22 : vector<2x8x8xf32>
    %24 = arith.mulf %23, %23 : vector<2x8x8xf32>
    %25 = vector.shape_cast %24 : vector<2x8x8xf32> to vector<1x2x8x8xf32>
    %cst_22 = arith.constant dense<0.000000e+00> : vector<1xf32>
    %26 = vector.multi_reduction <add>, %25, %cst_22 [1, 2, 3] : vector<1x2x8x8xf32> to vector<1xf32>
    %27 = vector.shape_cast %26 : vector<1xf32> to vector<1x1x1x1xf32>
    %28 = vector.extract %27[0, 0, 0, 0] : f32 from vector<1x1x1x1xf32>
    %29 = vector.broadcast %28 : f32 to vector<1x1xf32>
    %30 = math.sqrt %29 : vector<1x1xf32>
    %31 = vector.shape_cast %30 : vector<1x1xf32> to vector<1x1x1xf32>
    %cst_23 = arith.constant dense<0.000000e+00> : vector<1xf32>
    %32 = vector.multi_reduction <add>, %31, %cst_23 [1, 2] : vector<1x1x1xf32> to vector<1xf32>
    %33 = vector.shape_cast %32 : vector<1xf32> to vector<1x1x1xf32>
    %34 = vector.extract %33[0, 0, 0] : f32 from vector<1x1x1xf32>
    %cst_24 = arith.constant 5.000000e-01 : f32
    %35 = arith.mulf %34, %cst_24 : f32
    %c0_25 = arith.constant 0 : index
    %c0_26 = arith.constant 0 : index
    %c0_27 = arith.constant 0 : index
    %36 = vector.load %arg4[%c0_25, %c0_26, %c0_27] : memref<2x8x8xf32, #tpu.memory_space<vmem>>, vector<2x8x8xf32>
    %37 = tpu.iota {dimensions = array<i32: 1>} : vector<2x8x8xi32>
    %38 = tpu.iota {dimensions = array<i32: 2>} : vector<2x8x8xi32>
    %39 = arith.cmpi eq, %37, %38 : vector<2x8x8xi32>
    %40 = arith.extui %39 : vector<2x8x8xi1> to vector<2x8x8xi32>
    %41 = arith.sitofp %40 : vector<2x8x8xi32> to vector<2x8x8xf32>
    %42 = arith.subf %36, %41 : vector<2x8x8xf32>
    %43 = math.absf %42 : vector<2x8x8xf32>
    %44 = vector.shape_cast %43 : vector<2x8x8xf32> to vector<1x2x8x8xf32>
    %cst_28 = arith.constant dense<0.000000e+00> : vector<1xf32>
    %45 = vector.multi_reduction <add>, %44, %cst_28 [1, 2, 3] : vector<1x2x8x8xf32> to vector<1xf32>
    %46 = vector.shape_cast %45 : vector<1xf32> to vector<1x1x1x1xf32>
    %47 = vector.extract %46[0, 0, 0, 0] : f32 from vector<1x1x1x1xf32>
    %cst_29 = arith.constant 5.000000e-01 : f32
    %48 = arith.mulf %47, %cst_29 : f32
    %c0_30 = arith.constant 0 : index
    %c0_31 = arith.constant 0 : index
    %c0_32 = arith.constant 0 : index
    %49 = vector.load %arg6[%c0_30, %c0_31, %c0_32] : memref<2x8x32xf32, #tpu.memory_space<vmem>>, vector<2x8x32xf32>
    "tpu.trace_start"() <{level = 10 : i32, message = "bnd,bmd->bnm"}> : () -> ()
    %cst_33 = arith.constant dense<0.000000e+00> : vector<2x8x8xf32>
    %50 = tpu.matmul %49, %49, %cst_33 {dimension_numbers = #tpu.dot_dimension_numbers<[2], [2], [1], [1], [0, 0, 0, 1, 1, 1], [0], [0]>} : vector<2x8x32xf32>, vector<2x8x32xf32>, vector<2x8x8xf32> -> vector<2x8x8xf32>
    "tpu.trace_stop"() : () -> ()
    %51 = arith.mulf %49, %49 : vector<2x8x32xf32>
    %cst_34 = arith.constant dense<0.000000e+00> : vector<2x8xf32>
    %52 = vector.multi_reduction <add>, %51, %cst_34 [2] : vector<2x8x32xf32> to vector<2x8xf32>
    %53 = vector.shape_cast %52 : vector<2x8xf32> to vector<2x8x1xf32>
    %cst_35 = arith.constant dense<0.000000e+00> : vector<2x8xf32>
    %54 = vector.multi_reduction <add>, %51, %cst_35 [2] : vector<2x8x32xf32> to vector<2x8xf32>
    %55 = vector.shape_cast %54 : vector<2x8xf32> to vector<2x1x8xf32>
    %56 = vector.broadcast %53 : vector<2x8x1xf32> to vector<2x8x8xf32>
    %57 = vector.broadcast %55 : vector<2x1x8xf32> to vector<2x8x8xf32>
    %58 = arith.mulf %56, %57 : vector<2x8x8xf32>
    %cst_36 = arith.constant 9.99999997E-7 : f32
    %59 = vector.broadcast %cst_36 : f32 to vector<2x8x8xf32>
    %60 = arith.maximumf %58, %59 : vector<2x8x8xf32>
    %61 = math.rsqrt %60 : vector<2x8x8xf32>
    %62 = arith.mulf %50, %61 : vector<2x8x8xf32>
    %63 = tpu.iota {dimensions = array<i32: 1>} : vector<2x8x8xi32>
    %64 = tpu.iota {dimensions = array<i32: 2>} : vector<2x8x8xi32>
    %65 = arith.cmpi eq, %63, %64 : vector<2x8x8xi32>
    %66 = arith.extui %65 : vector<2x8x8xi1> to vector<2x8x8xi32>
    %67 = arith.sitofp %66 : vector<2x8x8xi32> to vector<2x8x8xf32>
    %68 = math.absf %62 : vector<2x8x8xf32>
    %69 = arith.subf %68, %67 : vector<2x8x8xf32>
    %70 = vector.shape_cast %69 : vector<2x8x8xf32> to vector<1x2x8x8xf32>
    %cst_37 = arith.constant dense<0.000000e+00> : vector<1xf32>
    %71 = vector.multi_reduction <add>, %70, %cst_37 [1, 2, 3] : vector<1x2x8x8xf32> to vector<1xf32>
    %72 = vector.shape_cast %71 : vector<1xf32> to vector<1x1x1x1xf32>
    %73 = vector.extract %72[0, 0, 0, 0] : f32 from vector<1x1x1x1xf32>
    %cst_38 = arith.constant 0.00892857183 : f32
    %74 = arith.mulf %73, %cst_38 : f32
    %75 = arith.addf %20, %35 : f32
    %cst_39 = arith.constant 1.000000e-01 : f32
    %76 = arith.mulf %cst_39, %74 : f32
    %77 = arith.addf %75, %76 : f32
    %cst_40 = arith.constant 1.000000e-01 : f32
    %78 = arith.mulf %cst_40, %48 : f32
    %79 = arith.addf %77, %78 : f32
    %c0_41 = arith.constant 0 : index
    %80 = memref.load %arg7[%c0_41] : memref<5xf32, #tpu.memory_space<smem>>
    memref.store %79, %arg7[%c0_41] : memref<5xf32, #tpu.memory_space<smem>>
    %c1 = arith.constant 1 : index
    %81 = memref.load %arg7[%c1] : memref<5xf32, #tpu.memory_space<smem>>
    memref.store %20, %arg7[%c1] : memref<5xf32, #tpu.memory_space<smem>>
    %c2 = arith.constant 2 : index
    %82 = memref.load %arg7[%c2] : memref<5xf32, #tpu.memory_space<smem>>
    memref.store %35, %arg7[%c2] : memref<5xf32, #tpu.memory_space<smem>>
    %c3 = arith.constant 3 : index
    %83 = memref.load %arg7[%c3] : memref<5xf32, #tpu.memory_space<smem>>
    memref.store %74, %arg7[%c3] : memref<5xf32, #tpu.memory_space<smem>>
    %c4 = arith.constant 4 : index
    %84 = memref.load %arg7[%c4] : memref<5xf32, #tpu.memory_space<smem>>
    memref.store %48, %arg7[%c4] : memref<5xf32, #tpu.memory_space<smem>>
    return
  }
}

</mosaic_0001>

<llo_original>
// kernel: reg_loss.1
$region0: #{reg_loss.1}
  #allocation0 [shape = 'u32[]', space=smem, size = 0x4, offset = 0x4, fixed_abs, tag = 'smem constant byte address 0x4 - core index']
  #allocation1 [shape = 'u32[144,128]{1,0:T(1,128)}', space=vmem, size = 0x12000, scoped, tag = 'internal scratch']
  %s0 = inlined_call_operand.hbm [shape: f32[2,8,32], index: 0, kind: input, shape index: {}]
  %s1 = inlined_call_operand.hbm [shape: f32[2,8,32], index: 1, kind: input, shape index: {}]
  %s2 = inlined_call_operand.hbm [shape: f32[2,8,32], index: 2, kind: input, shape index: {}]
  %s3 = inlined_call_operand.hbm [shape: f32[2,8,32], index: 3, kind: input, shape index: {}]
  %s4 = inlined_call_operand.vmem [shape: f32[2,8,8], index: 4, kind: input, shape index: {}]
  %s5 = inlined_call_operand.hbm [shape: f32[2,8,8], index: 5, kind: input, shape index: {}]
  %s6 = inlined_call_operand.hbm [shape: f32[2,8,32], index: 6, kind: input, shape index: {}]
  %s7 = inlined_call_operand.vmem [shape: f32[5], index: 7, kind: output, shape index: {}]
  %s8 = sld [smem:[#allocation0]]
  $region62: #{reg_loss.1} parent=0
    _
  %s10 = ssub.s32 1, %s8
  %s11 = scalar_select 0, %s10, %s8
  $region1: #{reg_loss.1} parent=0
    #allocation2 [shape = 'u8[8192]{0}', space=vmem, size = 0x2000, scoped, tag = 'input window, operand 0, single buffered']
    #allocation3 [shape = 's32[1]{0}', space=sflag, size = 0x4, scoped, tag = 'scoped memory for reg_loss.1']
    #allocation4 [shape = 's32[1]{0}', space=sflag, size = 0x4, scoped, tag = 'scoped memory for reg_loss.1']
    #allocation5 [shape = 'u8[8192]{0}', space=vmem, size = 0x2000, scoped, tag = 'input window, operand 1, single buffered']
    #allocation6 [shape = 's32[1]{0}', space=sflag, size = 0x4, scoped, tag = 'scoped memory for reg_loss.1']
    #allocation7 [shape = 'u8[8192]{0}', space=vmem, size = 0x2000, scoped, tag = 'input window, operand 2, single buffered']
    #allocation8 [shape = 'u8[8192]{0}', space=vmem, size = 0x2000, scoped, tag = 'input window, operand 3, single buffered']
    #allocation9 [shape = 's32[1]{0}', space=sflag, size = 0x4, scoped, tag = 'scoped memory for reg_loss.1']
    #allocation10 [shape = 'u8[8192]{0}', space=vmem, size = 0x2000, scoped, tag = 'input window, operand 5, single buffered']
    #allocation11 [shape = 'u8[8192]{0}', space=vmem, size = 0x2000, scoped, tag = 'input window, operand 6, single buffered']
    #allocation12 [shape = 's32[1]{0}', space=sflag, size = 0x4, scoped, tag = 'scoped memory for reg_loss.1']
    #allocation13 [shape = 'u8[512]{0}', space=smem, size = 0x200, scoped, tag = 'output window, operand 0, single buffered']
    %12 = vsyncpa [#allocation3], 0
    %13 = vsyncpa [#allocation6], 0
    %14 = vsyncpa [#allocation9], 0
    %15 = vsyncpa [#allocation12], 0
    %16 = vsyncpa [#allocation4], 0
    // Predicated region
    $region2: #{reg_loss.1} parent=1 // pred_check
      _
    $region3: #{reg_loss.1} parent=1 // pred_check_branch
      %18 = sbr.rel (0) target = $region5
    $region4: #{reg_loss.1} parent=1 // pred_region
      %s20 = ssub.s32 256, 256
      %21 = vsyncadd [#allocation3], %s20
      %s22 = sshll.u32 [#allocation2], 4
      %s23 = int_to_ptr.vmem [resolvable:$true] %s22
      %28 = dma.hbm_to_vmem [thread:$0]  %s0, 256, %s23, [#allocation3], 128, 128, 8
    $region5: #{reg_loss.1} parent=1 // pred_fallthru
      _
    // Predicated region
    $region6: #{reg_loss.1} parent=1 // pred_check
      _
    $region7: #{reg_loss.1} parent=1 // pred_check_branch
      %30 = sbr.rel (0) target = $region9
    $region8: #{reg_loss.1} parent=1 // pred_region
      %s32 = ssub.s32 256, 256
      %33 = vsyncadd [#allocation6], %s32
      %s34 = sshll.u32 [#allocation5], 4
      %s35 = int_to_ptr.vmem [resolvable:$true] %s34
      %40 = dma.hbm_to_vmem [thread:$0]  %s1, 256, %s35, [#allocation6], 128, 128, 8
    $region9: #{reg_loss.1} parent=1 // pred_fallthru
      _
    // Predicated region
    $region10: #{reg_loss.1} parent=1 // pred_check
      _
    $region11: #{reg_loss.1} parent=1 // pred_check_branch
      %42 = sbr.rel (0) target = $region13
    $region12: #{reg_loss.1} parent=1 // pred_region
      %s44 = ssub.s32 256, 256
      %45 = vsyncadd [#allocation6], %s44
      %s46 = sshll.u32 [#allocation7], 4
      %s47 = int_to_ptr.vmem [resolvable:$true] %s46
      %52 = dma.hbm_to_vmem [thread:$0]  %s2, 256, %s47, [#allocation6], 128, 128, 8
    $region13: #{reg_loss.1} parent=1 // pred_fallthru
      _
    // Predicated region
    $region14: #{reg_loss.1} parent=1 // pred_check
      _
    $region15: #{reg_loss.1} parent=1 // pred_check_branch
      %54 = sbr.rel (0) target = $region17
    $region16: #{reg_loss.1} parent=1 // pred_region
      %s56 = ssub.s32 256, 256
      %57 = vsyncadd [#allocation9], %s56
      %s58 = sshll.u32 [#allocation8], 4
      %s59 = int_to_ptr.vmem [resolvable:$true] %s58
      %64 = dma.hbm_to_vmem [thread:$0]  %s3, 256, %s59, [#allocation9], 128, 128, 8
    $region17: #{reg_loss.1} parent=1 // pred_fallthru
      _
    // Predicated region
    $region18: #{reg_loss.1} parent=1 // pred_check
      _
    $region19: #{reg_loss.1} parent=1 // pred_check_branch
      %66 = sbr.rel (0) target = $region21
    $region20: #{reg_loss.1} parent=1 // pred_region
      _
    $region21: #{reg_loss.1} parent=1 // pred_fallthru
      _
    // Predicated region
    $region22: #{reg_loss.1} parent=1 // pred_check
      _
    $region23: #{reg_loss.1} parent=1 // pred_check_branch
      %68 = sbr.rel (0) target = $region25
    $region24: #{reg_loss.1} parent=1 // pred_region
      %s70 = ssub.s32 256, 256
      %71 = vsyncadd [#allocation9], %s70
      %s72 = sshll.u32 [#allocation10], 4
      %s73 = int_to_ptr.vmem [resolvable:$true] %s72
      %78 = dma.hbm_to_vmem [thread:$0]  %s5, 256, %s73, [#allocation9], 128, 128, 8
    $region25: #{reg_loss.1} parent=1 // pred_fallthru
      _
    // Predicated region
    $region26: #{reg_loss.1} parent=1 // pred_check
      _
    $region27: #{reg_loss.1} parent=1 // pred_check_branch
      %80 = sbr.rel (0) target = $region29
    $region28: #{reg_loss.1} parent=1 // pred_region
      %s82 = ssub.s32 256, 256
      %83 = vsyncadd [#allocation12], %s82
      %s84 = sshll.u32 [#allocation11], 4
      %s85 = int_to_ptr.vmem [resolvable:$true] %s84
      %90 = dma.hbm_to_vmem [thread:$0]  %s6, 256, %s85, [#allocation12], 128, 128, 8
    $region29: #{reg_loss.1} parent=1 // pred_fallthru
      _
    // Predicated region
    $region30: #{reg_loss.1} parent=1 // pred_check
      _
    $region31: #{reg_loss.1} parent=1 // pred_check_branch
      %92 = sbr.rel (0) target = $region33
    $region32: #{reg_loss.1} parent=1 // pred_region
      %93 = dma.done [#allocation3], 256
    $region33: #{reg_loss.1} parent=1 // pred_fallthru
      _
    // Predicated region
    $region34: #{reg_loss.1} parent=1 // pred_check
      _
    $region35: #{reg_loss.1} parent=1 // pred_check_branch
      %95 = sbr.rel (0) target = $region37
    $region36: #{reg_loss.1} parent=1 // pred_region
      %96 = dma.done [#allocation6], 256
    $region37: #{reg_loss.1} parent=1 // pred_fallthru
      _
    // Predicated region
    $region38: #{reg_loss.1} parent=1 // pred_check
      _
    $region39: #{reg_loss.1} parent=1 // pred_check_branch
      %98 = sbr.rel (0) target = $region41
    $region40: #{reg_loss.1} parent=1 // pred_region
      %99 = dma.done [#allocation6], 256
    $region41: #{reg_loss.1} parent=1 // pred_fallthru
      _
    // Predicated region
    $region42: #{reg_loss.1} parent=1 // pred_check
      _
    $region43: #{reg_loss.1} parent=1 // pred_check_branch
      %101 = sbr.rel (0) target = $region45
    $region44: #{reg_loss.1} parent=1 // pred_region
      %102 = dma.done [#allocation9], 256
    $region45: #{reg_loss.1} parent=1 // pred_fallthru
      _
    // Predicated region
    $region46: #{reg_loss.1} parent=1 // pred_check
      _
    $region47: #{reg_loss.1} parent=1 // pred_check_branch
      %104 = sbr.rel (0) target = $region49
    $region48: #{reg_loss.1} parent=1 // pred_region
      %105 = dma.done [#allocation9], 256
    $region49: #{reg_loss.1} parent=1 // pred_fallthru
      _
    // Predicated region
    $region50: #{reg_loss.1} parent=1 // pred_check
      _
    $region51: #{reg_loss.1} parent=1 // pred_check_branch
      %107 = sbr.rel (0) target = $region53
    $region52: #{reg_loss.1} parent=1 // pred_region
      %108 = dma.done [#allocation12], 256
    $region53: #{reg_loss.1} parent=1 // pred_fallthru
      _
    %v109 = vld [vmem:[#allocation2] sm:$0xff]
    %v110 = vld [vmem:[#allocation2 + $0x8] sm:$0xff]
    %v111 = vld [vmem:[#allocation7] sm:$0xff]
    %v112 = vld [vmem:[#allocation7 + $0x8] sm:$0xff]
    %v113 = vsub.f32 %v109, %v111
    %v114 = vsub.f32 %v110, %v112
    %v115 = vmul.f32 %v113, %v113
    %v116 = vmul.f32 %v114, %v114
    %vm117 = vcmask 261120
    %v118 = vsel %vm117, %v115, 0.0
    %v119 = vsel %vm117, %v116, 0.0
    %v120 = vadd.f32 %v118, %v119
    %121 = vadd.xlane.f32.xlu0 %v120
    %v122 = vpop.xlane.xlu0 %121
    %v123 = vrot.slane %v122, 4
    %v124 = vadd.f32 %v122, %v123
    %v125 = vrot.slane %v124, 2
    %v126 = vadd.f32 %v124, %v125
    %v127 = vrot.slane %v126, 1
    %v128 = vadd.f32 %v126, %v127
    %s129 = vtos %v128
    %s130 = smul.f32 %s129, 0.001953125
    %s131 = sadd.f32 %s130, 0.0
    %v132 = vld [vmem:[#allocation5] sm:$0xff]
    %v133 = vld [vmem:[#allocation5 + $0x8] sm:$0xff]
    %v134 = vld [vmem:[#allocation8] sm:$0xff]
    %v135 = vld [vmem:[#allocation8 + $0x8] sm:$0xff]
    %v136 = vsub.f32 %v132, %v134
    %v137 = vsub.f32 %v133, %v135
    %v138 = vmul.f32 %v136, %v136
    %v139 = vmul.f32 %v137, %v137
    %v140 = vsel %vm117, %v138, 0.0
    %v141 = vsel %vm117, %v139, 0.0
    %v142 = vadd.f32 %v140, %v141
    %143 = vadd.xlane.f32.xlu0 %v142
    %v144 = vpop.xlane.xlu0 %143
    %v145 = vrot.slane %v144, 4
    %v146 = vadd.f32 %v144, %v145
    %v147 = vrot.slane %v146, 2
    %v148 = vadd.f32 %v146, %v147
    %v149 = vrot.slane %v148, 1
    %v150 = vadd.f32 %v148, %v149
    %s151 = vtos %v150
    %s152 = smul.f32 %s151, 0.001953125
    %s153 = sadd.f32 %s131, %s152
    %s154 = smul.f32 %s153, 0.5
    %v155 = vld [vmem:[%s4] sm:$0xff]
    %v156 = vld [vmem:[%s4 + $0x8] sm:$0xff]
    %v157 = vld [vmem:[#allocation10] sm:$0xff]
    %v158 = vld [vmem:[#allocation10 + $0x8] sm:$0xff]
    %v159 = vsub.f32 %v155, %v157
    %v160 = vsub.f32 %v156, %v158
    %v161 = vmul.f32 %v159, %v159
    %v162 = vmul.f32 %v160, %v160
    %vm163 = vcmask 64512
    %v164 = vsel %vm163, %v161, 0.0
    %v165 = vsel %vm163, %v162, 0.0
    %v166 = vadd.f32 %v164, %v165
    %167 = vadd.xlane.f32.xlu0 %v166
    %v168 = vpop.xlane.xlu0 %167
    %v169 = vrot.slane %v168, 4
    %v170 = vadd.f32 %v168, %v169
    %v171 = vrot.slane %v170, 2
    %v172 = vadd.f32 %v170, %v171
    %v173 = vrot.slane %v172, 1
    %v174 = vadd.f32 %v172, %v173
    %s175 = vtos %v174
    %v176 = vstv %s175
    %v177 = vrsqrt.pop %v176
    %v178 = vmul.f32 %v176, %v177
    %vm179 = vcmp.eq.f32.partialorder %v176, inf
    %v180 = vsel %vm179, %v176, %v178
    %vm181 = vcmp.eq.f32.partialorder %v176, 0.0
    %v182 = vand.u32 %v176, 2147483648
    %v183 = vsel %vm181, %v182, %v180
    %v184 = vadd.f32 %v183, 0.0
    %s185 = vtos %v184
    %s186 = smul.f32 %s185, 0.5
    %v187 = vlaneseq
    %v188 = vshrl.u32 %v187, 7
    %v189 = vlaneseq
    %v190 = vand.u32 %v189, 127
    %vm191 = vcmp.eq.s32.totalorder %v188, %v190
    %v192 = vsel %vm191, 1, 0
    %v193 = vcvt.s32.f32 %v192
    %v194 = vsub.f32 %v155, %v193
    %v195 = vsub.f32 %v156, %v193
    %v196 = vand.u32 2147483647, %v194
    %v197 = vand.u32 2147483647, %v195
    %v198 = vsel %vm163, %v196, 0.0
    %v199 = vsel %vm163, %v197, 0.0
    %v200 = vadd.f32 %v198, %v199
    %201 = vadd.xlane.f32.xlu0 %v200
    %v202 = vpop.xlane.xlu0 %201
    %v203 = vrot.slane %v202, 4
    %v204 = vadd.f32 %v202, %v203
    %v205 = vrot.slane %v204, 2
    %v206 = vadd.f32 %v204, %v205
    %v207 = vrot.slane %v206, 1
    %v208 = vadd.f32 %v206, %v207
    %s209 = vtos %v208
    %s210 = smul.f32 %s209, 0.5
    %v211 = vld [vmem:[#allocation11] sm:$0xff]
    %v212 = vld [vmem:[#allocation11 + $0x8] sm:$0xff]
    %v214 = vsel %vm117, %v211, 0
    %216 = vmatprep.subr.mxu0 0.0
    %217 = vmatpush1.xpose.msra.mxu0 %v214
    %218 = vmatprep.subr.mxu0 0.0
    %219 = vmatpush1.xpose.msra.mxu0 0.0
    %220 = vmatprep.subr.mxu0 0.0
    %221 = vmatpush1.xpose.msra.mxu0 0.0
    %222 = vmatprep.subr.mxu0 0.0
    %223 = vmatpush1.xpose.msra.mxu0 0.0
    %224 = vmatprep.subr.mxu0 0.0
    %225 = vmatpush1.xpose.msra.mxu0 0.0
    %226 = vmatprep.subr.mxu0 0.0
    %227 = vmatpush1.xpose.msra.mxu0 0.0
    %228 = vmatprep.subr.mxu0 0.0
    %229 = vmatpush1.xpose.msra.mxu0 0.0
    %230 = vmatprep.subr.mxu0 0.0
    %231 = vmatpush1.xpose.msra.mxu0 0.0
    %232 = vmatprep.subr.mxu0 0.0
    %233 = vmatpush1.xpose.msra.mxu0 0.0
    %234 = vmatprep.subr.mxu0 0.0
    %235 = vmatpush1.xpose.msra.mxu0 0.0
    %236 = vmatprep.subr.mxu0 0.0
    %237 = vmatpush1.xpose.msra.mxu0 0.0
    %238 = vmatprep.subr.mxu0 0.0
    %239 = vmatpush1.xpose.msra.mxu0 0.0
    %240 = vmatprep.subr.mxu0 0.0
    %241 = vmatpush1.xpose.msra.mxu0 0.0
    %242 = vmatprep.subr.mxu0 0.0
    %243 = vmatpush1.xpose.msra.mxu0 0.0
    %244 = vmatprep.subr.mxu0 0.0
    %245 = vmatpush1.xpose.msra.mxu0 0.0
    %246 = vmatprep.subr.mxu0 0.0
    %247 = vmatpush1.xpose.msra.mxu0 0.0
    %248 = vmatprep.subr.mxu0 0.0
    %249 = vmatpush1.xpose.msra.mxu0 0.0
    %250 = vmatprep.subr.mxu0 0.0
    %251 = vmatpush1.xpose.msra.mxu0 0.0
    %252 = vmatprep.subr.mxu0 0.0
    %253 = vmatpush1.xpose.msra.mxu0 0.0
    %254 = vmatprep.subr.mxu0 0.0
    %255 = vmatpush1.xpose.msra.mxu0 0.0
    %256 = vmatprep.subr.mxu0 0.0
    %257 = vmatpush1.xpose.msra.mxu0 0.0
    %258 = vmatprep.subr.mxu0 0.0
    %259 = vmatpush1.xpose.msra.mxu0 0.0
    %260 = vmatprep.subr.mxu0 0.0
    %261 = vmatpush1.xpose.msra.mxu0 0.0
    %262 = vmatprep.subr.mxu0 0.0
    %263 = vmatpush1.xpose.msra.mxu0 0.0
    %264 = vmatprep.subr.mxu0 0.0
    %265 = vmatpush1.xpose.msra.mxu0 0.0
    %266 = vmatprep.subr.mxu0 0.0
    %267 = vmatpush1.xpose.msra.mxu0 0.0
    %268 = vmatprep.subr.mxu0 0.0
    %269 = vmatpush1.xpose.msra.mxu0 0.0
    %270 = vmatprep.subr.mxu0 0.0
    %271 = vmatpush1.xpose.msra.mxu0 0.0
    %272 = vmatprep.subr.mxu0 0.0
    %273 = vmatpush1.xpose.msra.mxu0 0.0
    %274 = vmatprep.subr.mxu0 0.0
    %275 = vmatpush1.xpose.msra.mxu0 0.0
    %276 = vmatprep.subr.mxu0 0.0
    %277 = vmatpush1.xpose.msra.mxu0 0.0
    %278 = vmatprep.subr.mxu0 0.0
    %279 = vmatpush1.xpose.msra.mxu0 0.0
    %280 = vmatprep.mubr.f32.mxu0 0.0
    %281 = vmatmul.mubr.f32.gmra.mrb[0].mxu0 %v214
    %v282 = vpop.f32.mrb[0].mxu0
    %v283 = vadd.f32 0.0, %v282
    %v284 = vpop.f32.mrb[0].mxu0
    %285 = vdwg.mxu0
    %v287 = vsel %vm117, %v212, 0
    %289 = vmatprep.subr.mxu0 0.0
    %290 = vmatpush1.xpose.msra.mxu0 %v287
    %291 = vmatprep.subr.mxu0 0.0
    %292 = vmatpush1.xpose.msra.mxu0 0.0
    %293 = vmatprep.subr.mxu0 0.0
    %294 = vmatpush1.xpose.msra.mxu0 0.0
    %295 = vmatprep.subr.mxu0 0.0
    %296 = vmatpush1.xpose.msra.mxu0 0.0
    %297 = vmatprep.subr.mxu0 0.0
    %298 = vmatpush1.xpose.msra.mxu0 0.0
    %299 = vmatprep.subr.mxu0 0.0
    %300 = vmatpush1.xpose.msra.mxu0 0.0
    %301 = vmatprep.subr.mxu0 0.0
    %302 = vmatpush1.xpose.msra.mxu0 0.0
    %303 = vmatprep.subr.mxu0 0.0
    %304 = vmatpush1.xpose.msra.mxu0 0.0
    %305 = vmatprep.subr.mxu0 0.0
    %306 = vmatpush1.xpose.msra.mxu0 0.0
    %307 = vmatprep.subr.mxu0 0.0
    %308 = vmatpush1.xpose.msra.mxu0 0.0
    %309 = vmatprep.subr.mxu0 0.0
    %310 = vmatpush1.xpose.msra.mxu0 0.0
    %311 = vmatprep.subr.mxu0 0.0
    %312 = vmatpush1.xpose.msra.mxu0 0.0
    %313 = vmatprep.subr.mxu0 0.0
    %314 = vmatpush1.xpose.msra.mxu0 0.0
    %315 = vmatprep.subr.mxu0 0.0
    %316 = vmatpush1.xpose.msra.mxu0 0.0
    %317 = vmatprep.subr.mxu0 0.0
    %318 = vmatpush1.xpose.msra.mxu0 0.0
    %319 = vmatprep.subr.mxu0 0.0
    %320 = vmatpush1.xpose.msra.mxu0 0.0
    %321 = vmatprep.subr.mxu0 0.0
    %322 = vmatpush1.xpose.msra.mxu0 0.0
    %323 = vmatprep.subr.mxu0 0.0
    %324 = vmatpush1.xpose.msra.mxu0 0.0
    %325 = vmatprep.subr.mxu0 0.0
    %326 = vmatpush1.xpose.msra.mxu0 0.0
    %327 = vmatprep.subr.mxu0 0.0
    %328 = vmatpush1.xpose.msra.mxu0 0.0
    %329 = vmatprep.subr.mxu0 0.0
    %330 = vmatpush1.xpose.msra.mxu0 0.0
    %331 = vmatprep.subr.mxu0 0.0
    %332 = vmatpush1.xpose.msra.mxu0 0.0
    %333 = vmatprep.subr.mxu0 0.0
    %334 = vmatpush1.xpose.msra.mxu0 0.0
    %335 = vmatprep.subr.mxu0 0.0
    %336 = vmatpush1.xpose.msra.mxu0 0.0
    %337 = vmatprep.subr.mxu0 0.0
    %338 = vmatpush1.xpose.msra.mxu0 0.0
    %339 = vmatprep.subr.mxu0 0.0
    %340 = vmatpush1.xpose.msra.mxu0 0.0
    %341 = vmatprep.subr.mxu0 0.0
    %342 = vmatpush1.xpose.msra.mxu0 0.0
    %343 = vmatprep.subr.mxu0 0.0
    %344 = vmatpush1.xpose.msra.mxu0 0.0
    %345 = vmatprep.subr.mxu0 0.0
    %346 = vmatpush1.xpose.msra.mxu0 0.0
    %347 = vmatprep.subr.mxu0 0.0
    %348 = vmatpush1.xpose.msra.mxu0 0.0
    %349 = vmatprep.subr.mxu0 0.0
    %350 = vmatpush1.xpose.msra.mxu0 0.0
    %351 = vmatprep.subr.mxu0 0.0
    %352 = vmatpush1.xpose.msra.mxu0 0.0
    %353 = vmatprep.mubr.f32.mxu0 0.0
    %354 = vmatmul.mubr.f32.gmra.mrb[0].mxu0 %v287
    %v355 = vpop.f32.mrb[0].mxu0
    %v356 = vadd.f32 0.0, %v355
    %v357 = vpop.f32.mrb[0].mxu0
    %358 = vdwg.mxu0
    %v359 = vmul.f32 %v211, %v211
    %v360 = vmul.f32 %v212, %v212
    %v361 = vsel %vm117, %v359, 0.0
    %362 = vadd.xlane.f32.xlu0 %v361
    %v363 = vpop.xlane.xlu0 %362
    %v364 = vsel %vm117, %v360, 0.0
    %365 = vadd.xlane.f32.xlu0 %v364
    %v366 = vpop.xlane.xlu0 %365
    %v369 = vlaneseq
    %v370 = vshrl.u32 %v369, 7
    %v371 = vsub.s32 %v190, %v370
    %v372 = vrot.slane %v363, %v371
    %v373 = vlaneseq
    %v374 = vshrl.u32 %v373, 7
    %v375 = vsub.s32 %v190, %v374
    %v376 = vrot.slane %v366, %v375
    %vm377 = vcmask 1042434
    %v378 = vsel %vm377, %v372, %v372
    %vm379 = vcmask 1043459
    %v380 = vsel %vm379, %v372, %v378
    %vm381 = vcmask 1044484
    %v382 = vsel %vm381, %v372, %v380
    %vm383 = vcmask 1045509
    %v384 = vsel %vm383, %v372, %v382
    %vm385 = vcmask 1046534
    %v386 = vsel %vm385, %v372, %v384
    %vm387 = vcmask 1047559
    %v388 = vsel %vm387, %v372, %v386
    %v389 = vsel %vm377, %v376, %v376
    %v390 = vsel %vm379, %v376, %v389
    %v391 = vsel %vm381, %v376, %v390
    %v392 = vsel %vm383, %v376, %v391
    %v393 = vsel %vm385, %v376, %v392
    %v394 = vsel %vm387, %v376, %v393
    %v397 = vmul.f32 %v363, %v388
    %v398 = vmul.f32 %v366, %v394
    %v399 = vmax.f32 %v397, 1e-06
    %v400 = vmax.f32 %v398, 1e-06
    %v401 = vrsqrt.pop %v399
    %v402 = vrsqrt.pop %v400
    %v403 = vmul.f32 %v283, %v401
    %v404 = vmul.f32 %v356, %v402
    %v405 = vand.u32 2147483647, %v403
    %v406 = vand.u32 2147483647, %v404
    %v407 = vsub.f32 %v405, %v193
    %v408 = vsub.f32 %v406, %v193
    %v409 = vsel %vm163, %v407, 0.0
    %v410 = vsel %vm163, %v408, 0.0
    %v411 = vadd.f32 %v409, %v410
    %412 = vadd.xlane.f32.xlu0 %v411
    %v413 = vpop.xlane.xlu0 %412
    %v414 = vrot.slane %v413, 4
    %v415 = vadd.f32 %v413, %v414
    %v416 = vrot.slane %v415, 2
    %v417 = vadd.f32 %v415, %v416
    %v418 = vrot.slane %v417, 1
    %v419 = vadd.f32 %v417, %v418
    %s420 = vtos %v419
    %s421 = smul.f32 %s420, 0.008928572
    %s422 = sadd.f32 %s154, %s186
    %s423 = smul.f32 %s421, 0.1
    %s424 = sadd.f32 %s422, %s423
    %s425 = smul.f32 %s210, 0.1
    %s426 = sadd.f32 %s424, %s425
    %s427 = scalar_lea.smem [#allocation13], 0
    %428 = sst [smem:[%s427]] %s426
    %s429 = scalar_lea.smem [#allocation13], 1
    %430 = sst [smem:[%s429]] %s154
    %s431 = scalar_lea.smem [#allocation13], 2
    %432 = sst [smem:[%s431]] %s186
    %s433 = scalar_lea.smem [#allocation13], 3
    %434 = sst [smem:[%s433]] %s421
    %s435 = scalar_lea.smem [#allocation13], 4
    %436 = sst [smem:[%s435]] %s210
    // Predicated region
    $region54: #{reg_loss.1} parent=1 // pred_check
      _
    $region55: #{reg_loss.1} parent=1 // pred_check_branch
      %438 = sbr.rel (0) target = $region57
    $region56: #{reg_loss.1} parent=1 // pred_region
      %s440 = ssub.s32 16, 16
      %441 = vsyncadd [#allocation4], %s440
      %s443 = sshll.u32 %s7, 4
      %s444 = int_to_ptr.vmem [resolvable:$true] %s443
      %446 = dma.smem_to_vmem [#allocation13], 16, %s444, [#allocation4]
    $region57: #{reg_loss.1} parent=1 // pred_fallthru
      _
    // Predicated region
    $region58: #{reg_loss.1} parent=1 // pred_check
      _
    $region59: #{reg_loss.1} parent=1 // pred_check_branch
      %448 = sbr.rel (0) target = $region61
    $region60: #{reg_loss.1} parent=1 // pred_region
      %449 = dma.done [#allocation4], 16
    $region61: #{reg_loss.1} parent=1 // pred_fallthru
      _
    %450 = sfence
    %451 = vsyncpa [#allocation3], 1
    %452 = vsyncpa [#allocation6], 1
    %453 = vsyncpa [#allocation9], 1
    %454 = vsyncpa [#allocation12], 1
    %455 = vsyncpa [#allocation4], 1

</llo_original>
